<compile_context>
chip_gen: v5e
topology: v5e:2x2
jax: 0.10.0
libtpu: 0.0.40
codegen_flags: <defaults>
</compile_context>

<pallas_src>
import jax
import jax.numpy as jnp
from jax.experimental import pallas as pl
from jax.experimental.pallas import tpu as pltpu

_LANE = 128
_SUBLANE = 8


def _round_up(n, m):
    return ((n + m - 1) // m) * m


def _tpu_vmem_budget():
    """(physical VMEM per TC, scoped limit to request).

    v5e/v6e: 128 MiB physical -> ~102 MiB limit.
    v7x:      64 MiB physical -> ~51 MiB limit (headroom for compiler scratch).
    """
    try:
        vmem = int(pltpu.get_tpu_info().vmem_capacity_bytes)
    except Exception:
        vmem = 64 * 1024 * 1024  # conservative (v7x-sized) fallback
    limit = min(int(0.8 * vmem), vmem - 8 * 1024 * 1024)
    return vmem, max(limit, 16 * 1024 * 1024)


def prepare_fcnn_params(params, *, weight_dtype=jnp.float32, hidden_align=_LANE):
    """Pad / cast parameters ONCE, outside the per-call path.

    w1: (in_dim, H) -> (in_dim, h_p)   (rows NOT padded: in_dim stays full dim)
    w2: (H, H)      -> (h_p, h_p)
    w3: (H, out)    -> (h_p, out_p)    (out padded lane-dense to 128)
    Biases padded to match, kept in f32 (added to the f32 MXU accumulator).
    Zero padding is exact: tanh(0)=0 and padded weight rows/cols are zero.
    hidden_align=256 can be used on v6e/v7x when MXU-bound (2x256^2 MXU).
    """
    in_dim, H = params["w1"].shape
    out_dim = params["w3"].shape[1]
    h_p = _round_up(H, hidden_align)
    out_p = _round_up(out_dim, _LANE)

    def pad2(a, rows, cols):
        r, c = a.shape
        if r == rows and c == cols:
            return a
        return jnp.pad(a, ((0, rows - r), (0, cols - c)))

    prepped = {
        "w1": pad2(params["w1"], in_dim, h_p).astype(weight_dtype),
        "b1": pad2(params["b1"].reshape(1, -1), 1, h_p).astype(jnp.float32),
        "w2": pad2(params["w2"], h_p, h_p).astype(weight_dtype),
        "b2": pad2(params["b2"].reshape(1, -1), 1, h_p).astype(jnp.float32),
        "w3": pad2(params["w3"], h_p, out_p).astype(weight_dtype),
        "b3": pad2(params["b3"].reshape(1, -1), 1, out_p).astype(jnp.float32),
    }
    meta = {"in_dim": in_dim, "hidden": H, "out_dim": out_dim,
            "h_p": h_p, "out_p": out_p}
    return prepped, meta


def fcnn_kernel(x_ref, w1_ref, b1_ref, w2_ref, b2_ref, w3_ref, b3_ref, o_ref):
    wdt = w1_ref.dtype  # bf16 or f32; .astype is a no-op for f32 operands.

    # Layer 1: Linear(in -> hidden) + tanh  (f32 accumulate on the MXU)
    h1 = jnp.tanh(
        jnp.dot(x_ref[...].astype(wdt), w1_ref[...],
                preferred_element_type=jnp.float32)
        + b1_ref[...]
    )
    # Layer 2: Linear(hidden -> hidden) + tanh
    h2 = jnp.tanh(
        jnp.dot(h1.astype(wdt), w2_ref[...],
                preferred_element_type=jnp.float32)
        + b2_ref[...]
    )
    # Layer 3: Linear(hidden -> out), no activation
    out = (
        jnp.dot(h2.astype(wdt), w3_ref[...],
                preferred_element_type=jnp.float32)
        + b3_ref[...]
    )
    o_ref[...] = out.astype(o_ref.dtype)


def _pick_tb(B, *, in_dim, h_p, out_p, weight_bytes, vmem_limit):
    """Batch tile: as large as the VMEM budget allows (amortizes the ~0.35us
    per-grid-step overhead), capped per generation, and small enough to give
    >=2 grid steps when the batch allows it (v7x megacore)."""
    b8 = _round_up(max(B, 1), _SUBLANE)
    if b8 <= _SUBLANE:
        return _SUBLANE
    # Per-row f32 VMEM cost: x (2 pipeline buffers) + out (2 buffers)
    # + the (tb, h_p) h1/h2 intermediates living between back-to-back matmuls.
    per_row = 4 * (2 * in_dim + 2 * out_p + 2 * h_p)
    budget = vmem_limit - weight_bytes - 2 * 1024 * 1024  # misc headroom
    cap_rows = max(_SUBLANE, budget // max(per_row, 1))
    # 128 MiB parts (v5e/v6e) can go to 1024 rows; v7x (64 MiB) stays <= 512.
    gen_cap = 1024 if vmem_limit > 80 * 1024 * 1024 else 512
    tb_max = max(_SUBLANE, min(gen_cap, (cap_rows // _SUBLANE) * _SUBLANE))
    # Guarantee >= 2 grid steps whenever b >= 16.
    tb = min(tb_max, _round_up(-(-b8 // 2), _SUBLANE))
    return max(_SUBLANE, tb)


def fcnn_forward(x, prepped, meta, *, tb=None):
    """Fused FCNN forward. x: (B, in_dim); prepped/meta from prepare_fcnn_params."""
    B, in_dim = x.shape
    assert in_dim == meta["in_dim"]
    h_p, out_p, out_dim = meta["h_p"], meta["out_p"], meta["out_dim"]

    w_itemsize = jnp.dtype(prepped["w1"].dtype).itemsize
    weight_bytes = (w_itemsize * (in_dim * h_p + h_p * h_p + h_p * out_p)
                    + 4 * (2 * h_p + out_p))

    _, vmem_limit = _tpu_vmem_budget()
    if tb is None:
        tb = _pick_tb(B, in_dim=in_dim, h_p=h_p, out_p=out_p,
                      weight_bytes=weight_bytes, vmem_limit=vmem_limit)
    assert tb % _SUBLANE == 0

    # Pad the batch (rows only, no lane padding of x) up to a multiple of tb.
    b_p = _round_up(max(B, tb), tb)
    x_p = x if b_p == B else jnp.pad(x, ((0, b_p - B), (0, 0)))

    grid = (b_p // tb,)
    # Constant-index-map operands never need a second pipeline buffer.
    resident = dict(pipeline_mode=pl.Buffered(1))

    in_specs = [
        # x: batch-tiled; last block dim == full array dim (no lane padding).
        pl.BlockSpec((tb, in_dim), lambda i: (i, 0)),
        pl.BlockSpec((in_dim, h_p), lambda i: (0, 0), **resident),   # w1
        pl.BlockSpec((1, h_p), lambda i: (0, 0), **resident),        # b1
        pl.BlockSpec((h_p, h_p), lambda i: (0, 0), **resident),      # w2
        pl.BlockSpec((1, h_p), lambda i: (0, 0), **resident),        # b2
        pl.BlockSpec((h_p, out_p), lambda i: (0, 0), **resident),    # w3
        pl.BlockSpec((1, out_p), lambda i: (0, 0), **resident),      # b3
    ]
    # Lane-dense output: full unmasked vst (no vst.msk for tiny out_dim).
    out_specs = pl.BlockSpec((tb, out_p), lambda i: (i, 0))

    out_padded = pl.pallas_call(
        fcnn_kernel,
        out_shape=jax.ShapeDtypeStruct((b_p, out_p), x.dtype),
        grid=grid,
        in_specs=in_specs,
        out_specs=out_specs,
        compiler_params=pltpu.CompilerParams(
            dimension_semantics=("parallel",),
            vmem_limit_bytes=vmem_limit,
        ),
    )(x_p, prepped["w1"], prepped["b1"], prepped["w2"], prepped["b2"],
      prepped["w3"], prepped["b3"])

    # Slice away the row/lane padding outside the kernel.
    return out_padded[:B, :out_dim]


def init_fcnn_params(key, in_dim, hidden_dim, out_dim, dtype=jnp.float32):
    """Deterministic init mimicking nn.Linear default (uniform +-1/sqrt(fan_in))."""
    ks = jax.random.split(key, 6)

    def uinit(k, shape, fan_in):
        bound = 1.0 / jnp.sqrt(fan_in)
        return jax.random.uniform(k, shape, dtype, minval=-bound, maxval=bound)

    return {
        "w1": uinit(ks[0], (in_dim, hidden_dim), in_dim),
        "b1": uinit(ks[1], (1, hidden_dim), in_dim),
        "w2": uinit(ks[2], (hidden_dim, hidden_dim), hidden_dim),
        "b2": uinit(ks[3], (1, hidden_dim), hidden_dim),
        "w3": uinit(ks[4], (hidden_dim, out_dim), hidden_dim),
        "b3": uinit(ks[5], (1, out_dim), hidden_dim),
    }


def fcnn_reference(x, p):
    h1 = jnp.tanh(x @ p["w1"] + p["b1"])
    h2 = jnp.tanh(h1 @ p["w2"] + p["b2"])
    return h2 @ p["w3"] + p["b3"]


if __name__ == "__main__":
    key = jax.random.PRNGKey(0)
    k_x, k_p = jax.random.split(key)

    # Small shapes consistent with the module's forward: x is (batch, in_dim).
    B, in_dim, hidden_dim, out_dim = 8, 4, 32, 3

    x = jax.random.normal(k_x, (B, in_dim), dtype=jnp.float32)
    params = init_fcnn_params(k_p, in_dim, hidden_dim, out_dim)

    # Pad / cast weights ONCE (f32 default keeps the 1e-5 reference check;
    # pass weight_dtype=jnp.bfloat16 for the fast path at realistic H).
    prepped, meta = prepare_fcnn_params(params)

    out = fcnn_forward(x, prepped, meta)
    out = jax.block_until_ready(out)

    # Correctness check against a pure-JAX reference.
    ref = fcnn_reference(x, params)
    assert out.shape == (B, out_dim)
    assert jnp.allclose(out, ref, atol=1e-5, rtol=1e-5)

    print("KERNEL_OK")
</pallas_src>

<mosaic_0001>
module attributes {stable_mosaic.version = 11 : i64} {
  func.func @fcnn_kernel(%arg0: i32, %arg1: memref<8x4xf32, #tpu.memory_space<vmem>>, %arg2: memref<4x128xf32, #tpu.memory_space<vmem>>, %arg3: memref<1x128xf32, #tpu.memory_space<vmem>>, %arg4: memref<128x128xf32, #tpu.memory_space<vmem>>, %arg5: memref<1x128xf32, #tpu.memory_space<vmem>>, %arg6: memref<128x128xf32, #tpu.memory_space<vmem>>, %arg7: memref<1x128xf32, #tpu.memory_space<vmem>>, %arg8: memref<8x128xf32, #tpu.memory_space<vmem>>) attributes {dimension_semantics = [#tpu.dimension_semantics<parallel>], iteration_bounds = array<i64: 1>, scalar_prefetch = 0 : i64, scratch_operands = 0 : i64, tpu.core_type = #tpu.core_type<tc>, window_params = [{transform_indices = @transform_0, window_bounds = array<i64: 8, 4>}, {pipeline_mode = #tpu.pipeline_mode<synchronous>, transform_indices = @transform_1, window_bounds = array<i64: 4, 128>}, {pipeline_mode = #tpu.pipeline_mode<synchronous>, transform_indices = @transform_2, window_bounds = array<i64: 1, 128>}, {pipeline_mode = #tpu.pipeline_mode<synchronous>, transform_indices = @transform_3, window_bounds = array<i64: 128, 128>}, {pipeline_mode = #tpu.pipeline_mode<synchronous>, transform_indices = @transform_4, window_bounds = array<i64: 1, 128>}, {pipeline_mode = #tpu.pipeline_mode<synchronous>, transform_indices = @transform_5, window_bounds = array<i64: 128, 128>}, {pipeline_mode = #tpu.pipeline_mode<synchronous>, transform_indices = @transform_6, window_bounds = array<i64: 1, 128>}, {transform_indices = @transform_7, window_bounds = array<i64: 8, 128>}]} {
    %c0 = arith.constant 0 : index
    %c0_0 = arith.constant 0 : index
    %0 = vector.load %arg1[%c0, %c0_0] : memref<8x4xf32, #tpu.memory_space<vmem>>, vector<8x4xf32>
    %c0_1 = arith.constant 0 : index
    %c0_2 = arith.constant 0 : index
    %1 = vector.load %arg2[%c0_1, %c0_2] : memref<4x128xf32, #tpu.memory_space<vmem>>, vector<4x128xf32>
    %cst = arith.constant dense<0.000000e+00> : vector<8x128xf32>
    %2 = tpu.matmul %0, %1, %cst {dimension_numbers = #tpu.dot_dimension_numbers<[1], [0], [0], [1], [0, 0, 1, 1], [], []>} : vector<8x4xf32>, vector<4x128xf32>, vector<8x128xf32> -> vector<8x128xf32>
    %c0_3 = arith.constant 0 : index
    %c0_4 = arith.constant 0 : index
    %3 = vector.load %arg3[%c0_3, %c0_4] : memref<1x128xf32, #tpu.memory_space<vmem>>, vector<1x128xf32>
    %4 = vector.broadcast %3 : vector<1x128xf32> to vector<8x128xf32>
    %5 = arith.addf %2, %4 : vector<8x128xf32>
    %6 = math.tanh %5 : vector<8x128xf32>
    %c0_5 = arith.constant 0 : index
    %c0_6 = arith.constant 0 : index
    %7 = vector.load %arg4[%c0_5, %c0_6] : memref<128x128xf32, #tpu.memory_space<vmem>>, vector<128x128xf32>
    %cst_7 = arith.constant dense<0.000000e+00> : vector<8x128xf32>
    %8 = tpu.matmul %6, %7, %cst_7 {dimension_numbers = #tpu.dot_dimension_numbers<[1], [0], [0], [1], [0, 0, 1, 1], [], []>} : vector<8x128xf32>, vector<128x128xf32>, vector<8x128xf32> -> vector<8x128xf32>
    %c0_8 = arith.constant 0 : index
    %c0_9 = arith.constant 0 : index
    %9 = vector.load %arg5[%c0_8, %c0_9] : memref<1x128xf32, #tpu.memory_space<vmem>>, vector<1x128xf32>
    %10 = vector.broadcast %9 : vector<1x128xf32> to vector<8x128xf32>
    %11 = arith.addf %8, %10 : vector<8x128xf32>
    %12 = math.tanh %11 : vector<8x128xf32>
    %c0_10 = arith.constant 0 : index
    %c0_11 = arith.constant 0 : index
    %13 = vector.load %arg6[%c0_10, %c0_11] : memref<128x128xf32, #tpu.memory_space<vmem>>, vector<128x128xf32>
    %cst_12 = arith.constant dense<0.000000e+00> : vector<8x128xf32>
    %14 = tpu.matmul %12, %13, %cst_12 {dimension_numbers = #tpu.dot_dimension_numbers<[1], [0], [0], [1], [0, 0, 1, 1], [], []>} : vector<8x128xf32>, vector<128x128xf32>, vector<8x128xf32> -> vector<8x128xf32>
    %c0_13 = arith.constant 0 : index
    %c0_14 = arith.constant 0 : index
    %15 = vector.load %arg7[%c0_13, %c0_14] : memref<1x128xf32, #tpu.memory_space<vmem>>, vector<1x128xf32>
    %16 = vector.broadcast %15 : vector<1x128xf32> to vector<8x128xf32>
    %17 = arith.addf %14, %16 : vector<8x128xf32>
    %c0_15 = arith.constant 0 : index
    %c0_16 = arith.constant 0 : index
    %18 = vector.load %arg8[%c0_15, %c0_16] : memref<8x128xf32, #tpu.memory_space<vmem>>, vector<8x128xf32>
    tpu.vector_store %arg8[%c0_15, %c0_16], %17 {strides = array<i32>} : memref<8x128xf32, #tpu.memory_space<vmem>>, vector<8x128xf32>,
    return
  }
  func.func @transform_0(%arg0: i32) -> (i32, i32) {
    %c0_i32 = arith.constant 0 : i32
    %c0_i32_0 = arith.constant 0 : i32
    return %arg0, %c0_i32 : i32, i32
  }
  func.func @transform_1(%arg0: i32) -> (i32, i32) {
    %c0_i32 = arith.constant 0 : i32
    %c0_i32_0 = arith.constant 0 : i32
    %c0_i32_1 = arith.constant 0 : i32
    return %c0_i32, %c0_i32_0 : i32, i32
  }
  func.func @transform_2(%arg0: i32) -> (i32, i32) {
    %c0_i32 = arith.constant 0 : i32
    %c0_i32_0 = arith.constant 0 : i32
    %c0_i32_1 = arith.constant 0 : i32
    return %c0_i32, %c0_i32_0 : i32, i32
  }
  func.func @transform_3(%arg0: i32) -> (i32, i32) {
    %c0_i32 = arith.constant 0 : i32
    %c0_i32_0 = arith.constant 0 : i32
    %c0_i32_1 = arith.constant 0 : i32
    return %c0_i32, %c0_i32_0 : i32, i32
  }
  func.func @transform_4(%arg0: i32) -> (i32, i32) {
    %c0_i32 = arith.constant 0 : i32
    %c0_i32_0 = arith.constant 0 : i32
    %c0_i32_1 = arith.constant 0 : i32
    return %c0_i32, %c0_i32_0 : i32, i32
  }
  func.func @transform_5(%arg0: i32) -> (i32, i32) {
    %c0_i32 = arith.constant 0 : i32
    %c0_i32_0 = arith.constant 0 : i32
    %c0_i32_1 = arith.constant 0 : i32
    return %c0_i32, %c0_i32_0 : i32, i32
  }
  func.func @transform_6(%arg0: i32) -> (i32, i32) {
    %c0_i32 = arith.constant 0 : i32
    %c0_i32_0 = arith.constant 0 : i32
    %c0_i32_1 = arith.constant 0 : i32
    return %c0_i32, %c0_i32_0 : i32, i32
  }
  func.func @transform_7(%arg0: i32) -> (i32, i32) {
    %c0_i32 = arith.constant 0 : i32
    %c0_i32_0 = arith.constant 0 : i32
    return %arg0, %c0_i32 : i32, i32
  }
}

</mosaic_0001>

<llo_original>
// kernel: tpu_custom_call.1
$region0: #{tpu_custom_call.1}
  #allocation0 [shape = 'u32[]', space=smem, size = 0x4, offset = 0x4, fixed_abs, tag = 'smem constant byte address 0x4 - core index']
  #allocation1 [shape = 'u32[72,128]{1,0:T(1,128)}', space=vmem, size = 0x9000, scoped, tag = 'internal scratch']
  %s0 = inlined_call_operand.vmem [shape: f32[8,4], index: 0, kind: input, shape index: {}]
  %s1 = inlined_call_operand.vmem [shape: f32[4,128], index: 1, kind: input, shape index: {}]
  %s2 = inlined_call_operand.vmem [shape: f32[1,128], index: 2, kind: input, shape index: {}]
  %s3 = inlined_call_operand.hbm [shape: f32[128,128], index: 3, kind: input, shape index: {}]
  %s4 = inlined_call_operand.vmem [shape: f32[1,128], index: 4, kind: input, shape index: {}]
  %s5 = inlined_call_operand.hbm [shape: f32[128,128], index: 5, kind: input, shape index: {}]
  %s6 = inlined_call_operand.vmem [shape: f32[1,128], index: 6, kind: input, shape index: {}]
  %s7 = inlined_call_operand.hbm [shape: f32[8,128], index: 7, kind: output, shape index: {}]
  %s8 = sld [smem:[#allocation0]]
  $region46: #{tpu_custom_call.1} parent=0
    _
  %s10 = ssub.s32 1, %s8
  %s11 = scalar_select 0, %s10, %s8
  $region1: #{tpu_custom_call.1} parent=0
    #allocation2 [shape = 'u8[65536]{0}', space=vmem, size = 0x10000, scoped, tag = 'input window, operand 3, single buffered']
    #allocation3 [shape = 's32[1]{0}', space=sflag, size = 0x4, scoped, tag = 'scoped memory for tpu_custom_call.1']
    #allocation4 [shape = 's32[1]{0}', space=sflag, size = 0x4, scoped, tag = 'scoped memory for tpu_custom_call.1']
    #allocation5 [shape = 'u8[65536]{0}', space=vmem, size = 0x10000, scoped, tag = 'input window, operand 5, single buffered']
    #allocation6 [shape = 's32[1]{0}', space=sflag, size = 0x4, scoped, tag = 'scoped memory for tpu_custom_call.1']
    #allocation7 [shape = 'u8[4096]{0}', space=vmem, size = 0x1000, scoped, tag = 'output window, operand 0, single buffered']
    %12 = vsyncpa [#allocation3], 0
    %13 = vsyncpa [#allocation6], 0
    %14 = vsyncpa [#allocation4], 0
    // Predicated region
    $region2: #{tpu_custom_call.1} parent=1 // pred_check
      _
    $region3: #{tpu_custom_call.1} parent=1 // pred_check_branch
      %16 = sbr.rel (0) target = $region5
    $region4: #{tpu_custom_call.1} parent=1 // pred_region
      _
    $region5: #{tpu_custom_call.1} parent=1 // pred_fallthru
      _
    // Predicated region
    $region6: #{tpu_custom_call.1} parent=1 // pred_check
      _
    $region7: #{tpu_custom_call.1} parent=1 // pred_check_branch
      %18 = sbr.rel (0) target = $region9
    $region8: #{tpu_custom_call.1} parent=1 // pred_region
      _
    $region9: #{tpu_custom_call.1} parent=1 // pred_fallthru
      _
    // Predicated region
    $region10: #{tpu_custom_call.1} parent=1 // pred_check
      _
    $region11: #{tpu_custom_call.1} parent=1 // pred_check_branch
      %20 = sbr.rel (0) target = $region13
    $region12: #{tpu_custom_call.1} parent=1 // pred_region
      _
    $region13: #{tpu_custom_call.1} parent=1 // pred_fallthru
      _
    // Predicated region
    $region14: #{tpu_custom_call.1} parent=1 // pred_check
      _
    $region15: #{tpu_custom_call.1} parent=1 // pred_check_branch
      %22 = sbr.rel (0) target = $region17
    $region16: #{tpu_custom_call.1} parent=1 // pred_region
      %24 = vsyncadd [#allocation3], 0
      %s25 = sshll.u32 %s3, 4
      %s26 = int_to_ptr.hbm [resolvable:$true] %s25
      %s27 = sshll.u32 [#allocation2], 4
      %s28 = int_to_ptr.vmem [resolvable:$true] %s27
      %33 = dma.hbm_to_vmem [thread:$0]  %s26, 2048, %s28, [#allocation3], 128, 128, 8
    $region17: #{tpu_custom_call.1} parent=1 // pred_fallthru
      _
    // Predicated region
    $region18: #{tpu_custom_call.1} parent=1 // pred_check
      _
    $region19: #{tpu_custom_call.1} parent=1 // pred_check_branch
      %35 = sbr.rel (0) target = $region21
    $region20: #{tpu_custom_call.1} parent=1 // pred_region
      _
    $region21: #{tpu_custom_call.1} parent=1 // pred_fallthru
      _
    // Predicated region
    $region22: #{tpu_custom_call.1} parent=1 // pred_check
      _
    $region23: #{tpu_custom_call.1} parent=1 // pred_check_branch
      %37 = sbr.rel (0) target = $region25
    $region24: #{tpu_custom_call.1} parent=1 // pred_region
      %39 = vsyncadd [#allocation6], 0
      %s40 = sshll.u32 %s5, 4
      %s41 = int_to_ptr.hbm [resolvable:$true] %s40
      %s42 = sshll.u32 [#allocation5], 4
      %s43 = int_to_ptr.vmem [resolvable:$true] %s42
      %48 = dma.hbm_to_vmem [thread:$0]  %s41, 2048, %s43, [#allocation6], 128, 128, 8
    $region25: #{tpu_custom_call.1} parent=1 // pred_fallthru
      _
    // Predicated region
    $region26: #{tpu_custom_call.1} parent=1 // pred_check
      _
    $region27: #{tpu_custom_call.1} parent=1 // pred_check_branch
      %50 = sbr.rel (0) target = $region29
    $region28: #{tpu_custom_call.1} parent=1 // pred_region
      _
    $region29: #{tpu_custom_call.1} parent=1 // pred_fallthru
      _
    // Predicated region
    $region30: #{tpu_custom_call.1} parent=1 // pred_check
      _
    $region31: #{tpu_custom_call.1} parent=1 // pred_check_branch
      %52 = sbr.rel (0) target = $region33
    $region32: #{tpu_custom_call.1} parent=1 // pred_region
      %54 = dma.done [#allocation3], 2048
    $region33: #{tpu_custom_call.1} parent=1 // pred_fallthru
      _
    // Predicated region
    $region34: #{tpu_custom_call.1} parent=1 // pred_check
      _
    $region35: #{tpu_custom_call.1} parent=1 // pred_check_branch
      %56 = sbr.rel (0) target = $region37
    $region36: #{tpu_custom_call.1} parent=1 // pred_region
      %58 = dma.done [#allocation6], 2048
    $region37: #{tpu_custom_call.1} parent=1 // pred_fallthru
      _
    %v59 = vld [vmem:[%s0] sm:$0xff]
    %v60 = vld [vmem:[%s1] sm:$0xf]
    %v61 = vld [vmem:[%s2] sm:$0x1]
    %v63 = vperm.slane %v61, 0
    %vm65 = vcmask 31744
    %v67 = vsel %vm65, %v59, 0
    %vm69 = vcmask 1043456
    %v71 = vsel %vm69, %v60, 0
    %73 = vmatpush.msra.mxu0 0.0
    %74 = vmatpush.msra.mxu0 0.0
    %75 = vmatpush.msra.mxu0 0.0
    %76 = vmatpush.msra.mxu0 0.0
    %77 = vmatpush.msra.mxu0 0.0
    %78 = vmatpush.msra.mxu0 0.0
    %79 = vmatpush.msra.mxu0 0.0
    %80 = vmatpush.msra.mxu0 0.0
    %81 = vmatpush.msra.mxu0 0.0
    %82 = vmatpush.msra.mxu0 0.0
    %83 = vmatpush.msra.mxu0 0.0
    %84 = vmatpush.msra.mxu0 0.0
    %85 = vmatpush.msra.mxu0 0.0
    %86 = vmatpush.msra.mxu0 0.0
    %87 = vmatpush.msra.mxu0 0.0
    %88 = vmatpush.msra.mxu0 %v71
    %89 = vmatmul.f32.gmra.mxu0 %v67
    %v90 = vpop.f32.mrf.mxu0
    %v91 = vadd.f32 %v63, %v90
    %92 = vdwg.mxu0
    %v93 = vtanh.pop %v91
    %v94 = vld [vmem:[#allocation2] sm:$0xff]
    %v95 = vld [vmem:[#allocation2 + $0x8] sm:$0xff]
    %v96 = vld [vmem:[#allocation2 + $0x10] sm:$0xff]
    %v97 = vld [vmem:[#allocation2 + $0x18] sm:$0xff]
    %v98 = vld [vmem:[#allocation2 + $0x20] sm:$0xff]
    %v99 = vld [vmem:[#allocation2 + $0x28] sm:$0xff]
    %v100 = vld [vmem:[#allocation2 + $0x30] sm:$0xff]
    %v101 = vld [vmem:[#allocation2 + $0x38] sm:$0xff]
    %v102 = vld [vmem:[#allocation2 + $0x40] sm:$0xff]
    %v103 = vld [vmem:[#allocation2 + $0x48] sm:$0xff]
    %v104 = vld [vmem:[#allocation2 + $0x50] sm:$0xff]
    %v105 = vld [vmem:[#allocation2 + $0x58] sm:$0xff]
    %v106 = vld [vmem:[#allocation2 + $0x60] sm:$0xff]
    %v107 = vld [vmem:[#allocation2 + $0x68] sm:$0xff]
    %v108 = vld [vmem:[#allocation2 + $0x70] sm:$0xff]
    %v109 = vld [vmem:[#allocation2 + $0x78] sm:$0xff]
    %v110 = vld [vmem:[%s4] sm:$0x1]
    %v112 = vperm.slane %v110, 0
    %114 = vmatpush.msra.mxu0 %v109
    %115 = vmatpush.msra.mxu0 %v108
    %116 = vmatpush.msra.mxu0 %v107
    %117 = vmatpush.msra.mxu0 %v106
    %118 = vmatpush.msra.mxu0 %v105
    %119 = vmatpush.msra.mxu0 %v104
    %120 = vmatpush.msra.mxu0 %v103
    %121 = vmatpush.msra.mxu0 %v102
    %122 = vmatpush.msra.mxu0 %v101
    %123 = vmatpush.msra.mxu0 %v100
    %124 = vmatpush.msra.mxu0 %v99
    %125 = vmatpush.msra.mxu0 %v98
    %126 = vmatpush.msra.mxu0 %v97
    %127 = vmatpush.msra.mxu0 %v96
    %128 = vmatpush.msra.mxu0 %v95
    %129 = vmatpush.msra.mxu0 %v94
    %130 = vmatmul.f32.gmra.mxu0 %v93
    %v131 = vpop.f32.mrf.mxu0
    %v132 = vadd.f32 %v112, %v131
    %133 = vdwg.mxu0
    %v134 = vtanh.pop %v132
    %v135 = vld [vmem:[#allocation5] sm:$0xff]
    %v136 = vld [vmem:[#allocation5 + $0x8] sm:$0xff]
    %v137 = vld [vmem:[#allocation5 + $0x10] sm:$0xff]
    %v138 = vld [vmem:[#allocation5 + $0x18] sm:$0xff]
    %v139 = vld [vmem:[#allocation5 + $0x20] sm:$0xff]
    %v140 = vld [vmem:[#allocation5 + $0x28] sm:$0xff]
    %v141 = vld [vmem:[#allocation5 + $0x30] sm:$0xff]
    %v142 = vld [vmem:[#allocation5 + $0x38] sm:$0xff]
    %v143 = vld [vmem:[#allocation5 + $0x40] sm:$0xff]
    %v144 = vld [vmem:[#allocation5 + $0x48] sm:$0xff]
    %v145 = vld [vmem:[#allocation5 + $0x50] sm:$0xff]
    %v146 = vld [vmem:[#allocation5 + $0x58] sm:$0xff]
    %v147 = vld [vmem:[#allocation5 + $0x60] sm:$0xff]
    %v148 = vld [vmem:[#allocation5 + $0x68] sm:$0xff]
    %v149 = vld [vmem:[#allocation5 + $0x70] sm:$0xff]
    %v150 = vld [vmem:[#allocation5 + $0x78] sm:$0xff]
    %v151 = vld [vmem:[%s6] sm:$0x1]
    %v153 = vperm.slane %v151, 0
    %155 = vmatpush.msra.mxu0 %v150
    %156 = vmatpush.msra.mxu0 %v149
    %157 = vmatpush.msra.mxu0 %v148
    %158 = vmatpush.msra.mxu0 %v147
    %159 = vmatpush.msra.mxu0 %v146
    %160 = vmatpush.msra.mxu0 %v145
    %161 = vmatpush.msra.mxu0 %v144
    %162 = vmatpush.msra.mxu0 %v143
    %163 = vmatpush.msra.mxu0 %v142
    %164 = vmatpush.msra.mxu0 %v141
    %165 = vmatpush.msra.mxu0 %v140
    %166 = vmatpush.msra.mxu0 %v139
    %167 = vmatpush.msra.mxu0 %v138
    %168 = vmatpush.msra.mxu0 %v137
    %169 = vmatpush.msra.mxu0 %v136
    %170 = vmatpush.msra.mxu0 %v135
    %171 = vmatmul.f32.gmra.mxu0 %v134
    %v172 = vpop.f32.mrf.mxu0
    %v173 = vadd.f32 %v153, %v172
    %174 = vdwg.mxu0
    %175 = vst [vmem:[#allocation7] sm:$0xff] %v173
    // Predicated region
    $region38: #{tpu_custom_call.1} parent=1 // pred_check
      _
    $region39: #{tpu_custom_call.1} parent=1 // pred_check_branch
      %177 = sbr.rel (0) target = $region41
    $region40: #{tpu_custom_call.1} parent=1 // pred_region
      %179 = vsyncadd [#allocation4], 0
      %s181 = sshll.u32 [#allocation7], 4
      %s182 = int_to_ptr.vmem [resolvable:$true] %s181
      %s183 = sshll.u32 %s7, 4
      %s184 = int_to_ptr.hbm [resolvable:$true] %s183
      %186 = dma.vmem_to_hbm [thread:$0]  %s182, 128, %s184, [#allocation4]
    $region41: #{tpu_custom_call.1} parent=1 // pred_fallthru
      _
    // Predicated region
    $region42: #{tpu_custom_call.1} parent=1 // pred_check
      _
    $region43: #{tpu_custom_call.1} parent=1 // pred_check_branch
      %188 = sbr.rel (0) target = $region45
    $region44: #{tpu_custom_call.1} parent=1 // pred_region
      %190 = dma.done [#allocation4], 128
    $region45: #{tpu_custom_call.1} parent=1 // pred_fallthru
      _
    %191 = vsyncpa [#allocation3], 1
    %192 = vsyncpa [#allocation6], 1
    %193 = vsyncpa [#allocation4], 1

</llo_original>
